<compile_context>
chip_gen: v7x
topology: tpu7x:2x2x1
jax: 0.10.0
libtpu: 0.0.40
codegen_flags: <defaults>
</compile_context>

<pallas_src>
import functools
import math

import numpy as np
import jax
import jax.numpy as jnp
from jax.experimental import pallas as pl
from jax.experimental.pallas import tpu as pltpu


def _round_up(x: int, m: int) -> int:
    return -(-x // m) * m


def _cdiv(a: int, b: int) -> int:
    return -(-a // b)


def _sinc_resample_kernel(orig_freq: int, new_freq: int, gcd: int,
                          lowpass_filter_width: int = 6, rolloff: float = 0.99):
    """Matches torchaudio._get_sinc_resample_kernel for 'sinc_interp_hann'."""
    orig = orig_freq // gcd
    new = new_freq // gcd
    base_freq = min(orig, new) * rolloff
    width = int(math.ceil(lowpass_filter_width * orig / base_freq))
    idx = np.arange(-width, width + orig, dtype=np.float64) / orig              # (K,)
    t = np.arange(0, -new, -1, dtype=np.float64)[:, None] / new + idx[None, :]  # (new, K)
    t = t * base_freq
    t = np.clip(t, -lowpass_filter_width, lowpass_filter_width)
    window = np.cos(t * math.pi / lowpass_filter_width / 2.0) ** 2
    t = t * math.pi
    scale = base_freq / orig
    sinc = np.where(t == 0.0, 1.0, np.sin(t) / np.where(t == 0.0, 1.0, t))
    kernels = (sinc * window * scale).astype(np.float32)                         # (new, K)
    return kernels, width


def _choose_tf(num_frames: int, orig: int, new: int, n_q: int,
               itemsize: int, batch: int) -> int:
    """Frames per tile.  Budget = double-buffered input+output blocks with the
    real (128-lane padded) VMEM footprint; stays well under the 32 MiB limit."""
    lane_in = _round_up(orig, 128)
    lane_out = _round_up(new, 128)
    per_frame = 2 * (lane_in + lane_out) * itemsize          # x2: double buffering
    budget = 12 << 20
    tf = max(8, budget // per_frame)
    tf = min(tf, 4096)                                       # amortize ~0.35us/step grid overhead
    tf = min(tf, _round_up(num_frames, 8))
    # keep both TensorCores fed (v7x) when a single tile would cover everything
    if batch * _cdiv(num_frames, max(tf, 1)) < 2 and num_frames > 16:
        tf = _cdiv(num_frames, 2)
    tf = max(tf, n_q, 8)                                     # halo construction needs TF >= n_q
    return _round_up(tf, 8)


def _make_resample_call(B, nt, TF, n_q, orig, new, dtype):
    HALO = n_q

    def kernel(p_ref, w_ref, o_ref):
        # p_ref: (TF + n_q, orig)   polyphase rows for this tile (+ sublane halo)
        # w_ref: (n_q, orig, new)   resident filter operand (constant block index)
        # o_ref: (TF, new)          frames x phases for this tile
        acc = jnp.zeros((TF, new), jnp.float32)
        for q in range(n_q):                                 # n_q <= ~15, static unroll
            acc = acc + jnp.dot(p_ref[q:q + TF, :], w_ref[q],
                                preferred_element_type=jnp.float32)
        o_ref[...] = acc.astype(o_ref.dtype)

    itemsize = jnp.dtype(dtype).itemsize
    flops = 2 * B * nt * TF * (n_q * orig) * new
    bytes_accessed = itemsize * (B * nt * ((TF + HALO) * orig + TF * new)
                                 + n_q * orig * new)

    return pl.pallas_call(
        kernel,
        out_shape=jax.ShapeDtypeStruct((B, nt, TF, new), dtype),
        grid=(B, nt),
        in_specs=[
            pl.BlockSpec((None, None, TF + HALO, orig), lambda b, t: (b, t, 0, 0)),
            pl.BlockSpec((n_q, orig, new), lambda b, t: (0, 0, 0)),
        ],
        out_specs=pl.BlockSpec((None, None, TF, new), lambda b, t: (b, t, 0, 0)),
        compiler_params=pltpu.CompilerParams(
            dimension_semantics=("parallel", "parallel"),
            vmem_limit_bytes=32 * 1024 * 1024,
        ),
        cost_estimate=pl.CostEstimate(flops=int(flops), transcendentals=0,
                                      bytes_accessed=int(bytes_accessed)),
    )


def pallas_resample(x, source: int, target: int,
                    lowpass_filter_width: int = 6, rolloff: float = 0.99,
                    tile_frames=None):
    source = int(source)
    target = int(target)
    g = math.gcd(source, target)
    orig = source // g
    new = target // g
    if orig == new:
        return x

    kern, width = _sinc_resample_kernel(source, target, g,
                                        lowpass_filter_width, rolloff)
    K = kern.shape[1]                                  # = 2*width + orig
    n_q = _cdiv(K, orig)

    shape = x.shape
    L = int(shape[-1])
    cdtype = jnp.bfloat16 if x.dtype == jnp.bfloat16 else jnp.float32
    itemsize = jnp.dtype(cdtype).itemsize
    wav = x.reshape(-1, L).astype(cdtype)
    B = wav.shape[0]
    num_frames = L // orig + 1
    target_length = -((-new * L) // orig)              # ceil(new*L/orig), exact

    TF = _choose_tf(num_frames, orig, new, n_q, itemsize, B)
    if tile_frames is not None:                        # testing hook
        TF = _round_up(max(int(tile_frames), n_q, 8), 8)
    nt = _cdiv(num_frames, TF)
    F_pad = nt * TF

    # Polyphase view with a per-tile sublane halo, built from reshape/slice/concat
    # only (no XLA gather).  P[b, m, r] = padded[b, m*orig + r].
    total = (F_pad + TF) * orig
    pad_right = total - width - L
    assert pad_right >= width + orig, (pad_right, width, orig)
    padded = jnp.pad(wav, ((0, 0), (width, pad_right)))
    P = padded.reshape(B, F_pad + TF, orig)
    main = P[:, :F_pad].reshape(B, nt, TF, orig)
    halo = P[:, TF:TF + F_pad].reshape(B, nt, TF, orig)[:, :, :n_q]
    waveB = jnp.concatenate([main, halo], axis=2)      # (B, nt, TF + n_q, orig)

    # Filter as a small resident VMEM operand, zero-padded from K to n_q*orig taps.
    wmat = np.zeros((n_q * orig, new), np.float32)
    wmat[:K, :] = kern.T
    w_arr = jnp.asarray(wmat.reshape(n_q, orig, new), dtype=cdtype)

    out = _make_resample_call(B, nt, TF, n_q, orig, new, cdtype)(waveB, w_arr)

    # out[b, t, f, j] = y[b, (t*TF + f)*new + j]  ->  plain row-major reshape + trim.
    y = out.reshape(B, nt * TF * new)[:, :target_length]
    return y.astype(x.dtype).reshape(shape[:-1] + (target_length,))


def _np_reference_resample(x, source: int, target: int,
                           lowpass_filter_width: int = 6, rolloff: float = 0.99):
    """Exact float64 numpy reference of the same torchaudio math."""
    g = math.gcd(int(source), int(target))
    orig = int(source) // g
    new = int(target) // g
    if orig == new:
        return np.asarray(x)
    kern, width = _sinc_resample_kernel(source, target, g,
                                        lowpass_filter_width, rolloff)
    kern = kern.astype(np.float64)                     # (new, K)
    K = kern.shape[1]
    xs = np.asarray(x, dtype=np.float64)
    shape = xs.shape
    L = shape[-1]
    wav = xs.reshape(-1, L)
    num_frames = L // orig + 1
    padded = np.pad(wav, ((0, 0), (width, width + orig + K)))
    frames = np.stack([padded[:, f * orig: f * orig + K] for f in range(num_frames)],
                      axis=1)                          # (B, F, K)
    out = frames @ kern.T                              # (B, F, new)
    tl = -((-new * L) // orig)
    y = out.reshape(wav.shape[0], -1)[:, :tl]
    return y.reshape(shape[:-1] + (tl,))


if __name__ == "__main__":
    key = jax.random.PRNGKey(0)

    def _check(x, source, target, tile_frames=None, label=""):
        run = jax.jit(functools.partial(pallas_resample, source=source, target=target,
                                        tile_frames=tile_frames))
        y = jax.block_until_ready(run(x))
        y_ref = _np_reference_resample(np.asarray(x), source, target)
        assert y.shape == y_ref.shape, (label, y.shape, y_ref.shape)
        np.testing.assert_allclose(np.asarray(y, dtype=np.float64), y_ref,
                                   atol=1e-2, rtol=1e-2, err_msg=label)

    k1, k2, k3 = jax.random.split(key, 3)

    # Module-style small case: (batch, channels, time), source=8 -> target=12.
    _check(jax.random.normal(k1, (2, 4, 64), dtype=jnp.float32), 8, 12, label="8->12")
    # Real-world ratio (44.1kHz -> 48kHz): orig=147, new=160, K=161 -> MXU path.
    _check(jax.random.normal(k2, (2, 3, 1000), dtype=jnp.float32), 44100, 48000,
           label="44.1k->48k")
    # Multi-tile path with cross-tile halo.
    _check(jax.random.normal(k3, (2, 600), dtype=jnp.float32), 4, 6,
           tile_frames=64, label="4->6 tiled")

    print("KERNEL_OK")
</pallas_src>

<mosaic_0001>
module attributes {stable_mosaic.version = 11 : i64} {
  func.func @kernel(%arg0: i32, %arg1: i32, %arg2: memref<1x1x48x2xf32, #tpu.memory_space<vmem>>, %arg3: memref<8x2x3xf32, #tpu.memory_space<vmem>>, %arg4: memref<1x1x40x3xf32, #tpu.memory_space<vmem>>) attributes {dimension_semantics = [#tpu.dimension_semantics<parallel>, #tpu.dimension_semantics<parallel>], iteration_bounds = array<i64: 8, 1>, scalar_prefetch = 0 : i64, scratch_operands = 0 : i64, tpu.core_type = #tpu.core_type<tc>, window_params = [{transform_indices = @transform_0, window_bounds = array<i64: 1, 1, 48, 2>}, {pipeline_mode = #tpu.pipeline_mode<synchronous>, transform_indices = @transform_1, window_bounds = array<i64: 8, 2, 3>}, {transform_indices = @transform_2, window_bounds = array<i64: 1, 1, 40, 3>}]} {
    %cst = arith.constant 0.000000e+00 : f32
    %0 = vector.broadcast %cst : f32 to vector<40x3xf32>
    %c0 = arith.constant 0 : index
    %c0_0 = arith.constant 0 : index
    %c0_1 = arith.constant 0 : index
    %c0_2 = arith.constant 0 : index
    %1 = vector.load %arg2[%c0, %c0_0, %c0_1, %c0_2] : memref<1x1x48x2xf32, #tpu.memory_space<vmem>>, vector<1x1x40x2xf32>
    %2 = vector.shape_cast %1 : vector<1x1x40x2xf32> to vector<40x2xf32>
    %c0_3 = arith.constant 0 : index
    %c0_4 = arith.constant 0 : index
    %c0_5 = arith.constant 0 : index
    %3 = vector.load %arg3[%c0_3, %c0_4, %c0_5] : memref<8x2x3xf32, #tpu.memory_space<vmem>>, vector<1x2x3xf32>
    %4 = vector.shape_cast %3 : vector<1x2x3xf32> to vector<2x3xf32>
    %cst_6 = arith.constant dense<0.000000e+00> : vector<40x3xf32>
    %5 = tpu.matmul %2, %4, %cst_6 {dimension_numbers = #tpu.dot_dimension_numbers<[1], [0], [0], [1], [0, 0, 1, 1], [], []>} : vector<40x2xf32>, vector<2x3xf32>, vector<40x3xf32> -> vector<40x3xf32>
    %6 = arith.addf %0, %5 : vector<40x3xf32>
    %c0_7 = arith.constant 0 : index
    %c0_8 = arith.constant 0 : index
    %c1 = arith.constant 1 : index
    %c0_9 = arith.constant 0 : index
    %7 = vector.load %arg2[%c0_7, %c0_8, %c1, %c0_9] : memref<1x1x48x2xf32, #tpu.memory_space<vmem>>, vector<1x1x40x2xf32>
    %8 = vector.shape_cast %7 : vector<1x1x40x2xf32> to vector<40x2xf32>
    %c1_10 = arith.constant 1 : index
    %c0_11 = arith.constant 0 : index
    %c0_12 = arith.constant 0 : index
    %9 = vector.load %arg3[%c1_10, %c0_11, %c0_12] : memref<8x2x3xf32, #tpu.memory_space<vmem>>, vector<1x2x3xf32>
    %10 = vector.shape_cast %9 : vector<1x2x3xf32> to vector<2x3xf32>
    %cst_13 = arith.constant dense<0.000000e+00> : vector<40x3xf32>
    %11 = tpu.matmul %8, %10, %cst_13 {dimension_numbers = #tpu.dot_dimension_numbers<[1], [0], [0], [1], [0, 0, 1, 1], [], []>} : vector<40x2xf32>, vector<2x3xf32>, vector<40x3xf32> -> vector<40x3xf32>
    %12 = arith.addf %6, %11 : vector<40x3xf32>
    %c0_14 = arith.constant 0 : index
    %c0_15 = arith.constant 0 : index
    %c2 = arith.constant 2 : index
    %c0_16 = arith.constant 0 : index
    %13 = vector.load %arg2[%c0_14, %c0_15, %c2, %c0_16] : memref<1x1x48x2xf32, #tpu.memory_space<vmem>>, vector<1x1x40x2xf32>
    %14 = vector.shape_cast %13 : vector<1x1x40x2xf32> to vector<40x2xf32>
    %c2_17 = arith.constant 2 : index
    %c0_18 = arith.constant 0 : index
    %c0_19 = arith.constant 0 : index
    %15 = vector.load %arg3[%c2_17, %c0_18, %c0_19] : memref<8x2x3xf32, #tpu.memory_space<vmem>>, vector<1x2x3xf32>
    %16 = vector.shape_cast %15 : vector<1x2x3xf32> to vector<2x3xf32>
    %cst_20 = arith.constant dense<0.000000e+00> : vector<40x3xf32>
    %17 = tpu.matmul %14, %16, %cst_20 {dimension_numbers = #tpu.dot_dimension_numbers<[1], [0], [0], [1], [0, 0, 1, 1], [], []>} : vector<40x2xf32>, vector<2x3xf32>, vector<40x3xf32> -> vector<40x3xf32>
    %18 = arith.addf %12, %17 : vector<40x3xf32>
    %c0_21 = arith.constant 0 : index
    %c0_22 = arith.constant 0 : index
    %c3 = arith.constant 3 : index
    %c0_23 = arith.constant 0 : index
    %19 = vector.load %arg2[%c0_21, %c0_22, %c3, %c0_23] : memref<1x1x48x2xf32, #tpu.memory_space<vmem>>, vector<1x1x40x2xf32>
    %20 = vector.shape_cast %19 : vector<1x1x40x2xf32> to vector<40x2xf32>
    %c3_24 = arith.constant 3 : index
    %c0_25 = arith.constant 0 : index
    %c0_26 = arith.constant 0 : index
    %21 = vector.load %arg3[%c3_24, %c0_25, %c0_26] : memref<8x2x3xf32, #tpu.memory_space<vmem>>, vector<1x2x3xf32>
    %22 = vector.shape_cast %21 : vector<1x2x3xf32> to vector<2x3xf32>
    %cst_27 = arith.constant dense<0.000000e+00> : vector<40x3xf32>
    %23 = tpu.matmul %20, %22, %cst_27 {dimension_numbers = #tpu.dot_dimension_numbers<[1], [0], [0], [1], [0, 0, 1, 1], [], []>} : vector<40x2xf32>, vector<2x3xf32>, vector<40x3xf32> -> vector<40x3xf32>
    %24 = arith.addf %18, %23 : vector<40x3xf32>
    %c0_28 = arith.constant 0 : index
    %c0_29 = arith.constant 0 : index
    %c4 = arith.constant 4 : index
    %c0_30 = arith.constant 0 : index
    %25 = vector.load %arg2[%c0_28, %c0_29, %c4, %c0_30] : memref<1x1x48x2xf32, #tpu.memory_space<vmem>>, vector<1x1x40x2xf32>
    %26 = vector.shape_cast %25 : vector<1x1x40x2xf32> to vector<40x2xf32>
    %c4_31 = arith.constant 4 : index
    %c0_32 = arith.constant 0 : index
    %c0_33 = arith.constant 0 : index
    %27 = vector.load %arg3[%c4_31, %c0_32, %c0_33] : memref<8x2x3xf32, #tpu.memory_space<vmem>>, vector<1x2x3xf32>
    %28 = vector.shape_cast %27 : vector<1x2x3xf32> to vector<2x3xf32>
    %cst_34 = arith.constant dense<0.000000e+00> : vector<40x3xf32>
    %29 = tpu.matmul %26, %28, %cst_34 {dimension_numbers = #tpu.dot_dimension_numbers<[1], [0], [0], [1], [0, 0, 1, 1], [], []>} : vector<40x2xf32>, vector<2x3xf32>, vector<40x3xf32> -> vector<40x3xf32>
    %30 = arith.addf %24, %29 : vector<40x3xf32>
    %c0_35 = arith.constant 0 : index
    %c0_36 = arith.constant 0 : index
    %c5 = arith.constant 5 : index
    %c0_37 = arith.constant 0 : index
    %31 = vector.load %arg2[%c0_35, %c0_36, %c5, %c0_37] : memref<1x1x48x2xf32, #tpu.memory_space<vmem>>, vector<1x1x40x2xf32>
    %32 = vector.shape_cast %31 : vector<1x1x40x2xf32> to vector<40x2xf32>
    %c5_38 = arith.constant 5 : index
    %c0_39 = arith.constant 0 : index
    %c0_40 = arith.constant 0 : index
    %33 = vector.load %arg3[%c5_38, %c0_39, %c0_40] : memref<8x2x3xf32, #tpu.memory_space<vmem>>, vector<1x2x3xf32>
    %34 = vector.shape_cast %33 : vector<1x2x3xf32> to vector<2x3xf32>
    %cst_41 = arith.constant dense<0.000000e+00> : vector<40x3xf32>
    %35 = tpu.matmul %32, %34, %cst_41 {dimension_numbers = #tpu.dot_dimension_numbers<[1], [0], [0], [1], [0, 0, 1, 1], [], []>} : vector<40x2xf32>, vector<2x3xf32>, vector<40x3xf32> -> vector<40x3xf32>
    %36 = arith.addf %30, %35 : vector<40x3xf32>
    %c0_42 = arith.constant 0 : index
    %c0_43 = arith.constant 0 : index
    %c6 = arith.constant 6 : index
    %c0_44 = arith.constant 0 : index
    %37 = vector.load %arg2[%c0_42, %c0_43, %c6, %c0_44] : memref<1x1x48x2xf32, #tpu.memory_space<vmem>>, vector<1x1x40x2xf32>
    %38 = vector.shape_cast %37 : vector<1x1x40x2xf32> to vector<40x2xf32>
    %c6_45 = arith.constant 6 : index
    %c0_46 = arith.constant 0 : index
    %c0_47 = arith.constant 0 : index
    %39 = vector.load %arg3[%c6_45, %c0_46, %c0_47] : memref<8x2x3xf32, #tpu.memory_space<vmem>>, vector<1x2x3xf32>
    %40 = vector.shape_cast %39 : vector<1x2x3xf32> to vector<2x3xf32>
    %cst_48 = arith.constant dense<0.000000e+00> : vector<40x3xf32>
    %41 = tpu.matmul %38, %40, %cst_48 {dimension_numbers = #tpu.dot_dimension_numbers<[1], [0], [0], [1], [0, 0, 1, 1], [], []>} : vector<40x2xf32>, vector<2x3xf32>, vector<40x3xf32> -> vector<40x3xf32>
    %42 = arith.addf %36, %41 : vector<40x3xf32>
    %c0_49 = arith.constant 0 : index
    %c0_50 = arith.constant 0 : index
    %c7 = arith.constant 7 : index
    %c0_51 = arith.constant 0 : index
    %43 = vector.load %arg2[%c0_49, %c0_50, %c7, %c0_51] : memref<1x1x48x2xf32, #tpu.memory_space<vmem>>, vector<1x1x40x2xf32>
    %44 = vector.shape_cast %43 : vector<1x1x40x2xf32> to vector<40x2xf32>
    %c7_52 = arith.constant 7 : index
    %c0_53 = arith.constant 0 : index
    %c0_54 = arith.constant 0 : index
    %45 = vector.load %arg3[%c7_52, %c0_53, %c0_54] : memref<8x2x3xf32, #tpu.memory_space<vmem>>, vector<1x2x3xf32>
    %46 = vector.shape_cast %45 : vector<1x2x3xf32> to vector<2x3xf32>
    %cst_55 = arith.constant dense<0.000000e+00> : vector<40x3xf32>
    %47 = tpu.matmul %44, %46, %cst_55 {dimension_numbers = #tpu.dot_dimension_numbers<[1], [0], [0], [1], [0, 0, 1, 1], [], []>} : vector<40x2xf32>, vector<2x3xf32>, vector<40x3xf32> -> vector<40x3xf32>
    %48 = arith.addf %42, %47 : vector<40x3xf32>
    %c0_56 = arith.constant 0 : index
    %c0_57 = arith.constant 0 : index
    %c0_58 = arith.constant 0 : index
    %c0_59 = arith.constant 0 : index
    %49 = vector.load %arg4[%c0_56, %c0_57, %c0_58, %c0_59] : memref<1x1x40x3xf32, #tpu.memory_space<vmem>>, vector<1x1x40x3xf32>
    %50 = vector.shape_cast %49 : vector<1x1x40x3xf32> to vector<40x3xf32>
    %51 = vector.shape_cast %48 : vector<40x3xf32> to vector<1x1x40x3xf32>
    tpu.vector_store %arg4[%c0_56, %c0_57, %c0_58, %c0_59], %51 {strides = array<i32>} : memref<1x1x40x3xf32, #tpu.memory_space<vmem>>, vector<1x1x40x3xf32>,
    return
  }
  func.func @transform_0(%arg0: i32, %arg1: i32) -> (i32, i32, i32, i32) {
    %c0_i32 = arith.constant 0 : i32
    %c0_i32_0 = arith.constant 0 : i32
    %c0_i32_1 = arith.constant 0 : i32
    return %arg0, %arg1, %c0_i32, %c0_i32_0 : i32, i32, i32, i32
  }
  func.func @transform_1(%arg0: i32, %arg1: i32) -> (i32, i32, i32) {
    %c0_i32 = arith.constant 0 : i32
    %c0_i32_0 = arith.constant 0 : i32
    %c0_i32_1 = arith.constant 0 : i32
    %c0_i32_2 = arith.constant 0 : i32
    return %c0_i32, %c0_i32_0, %c0_i32_1 : i32, i32, i32
  }
  func.func @transform_2(%arg0: i32, %arg1: i32) -> (i32, i32, i32, i32) {
    %c0_i32 = arith.constant 0 : i32
    %c0_i32_0 = arith.constant 0 : i32
    %c0_i32_1 = arith.constant 0 : i32
    return %arg0, %arg1, %c0_i32, %c0_i32_0 : i32, i32, i32, i32
  }
}

</mosaic_0001>

<llo_original>
// kernel: pallas_resample.1
$region0: #{pallas_resample.1}
  #allocation0 [shape = 'u32[]', space=smem, size = 0x4, offset = 0x4, fixed_abs, tag = 'smem constant byte address 0x4 - core index']
  #allocation1 [shape = 'u32[144,128]{1,0:T(1,128)}', space=vmem, size = 0x12000, scoped, tag = 'internal scratch']
  %s0 = inlined_call_operand.vmem [shape: f32[8,1,48,2], index: 0, kind: input, shape index: {}]
  %s1 = inlined_call_operand.vmem [shape: f32[8,2,3], index: 1, kind: input, shape index: {}]
  %s2 = inlined_call_operand.vmem [shape: f32[8,1,40,3], index: 2, kind: output, shape index: {}]
  %s3 = sld [smem:[#allocation0]]
  $region41: #{pallas_resample.1} parent=0
    _
  %s5 = ssub.s32 1, %s3
  %s6 = scalar_select 0, %s5, %s3
  loop: start=0, step=1, limit=10
  $region2: #{pallas_resample.1} parent=0 // loop_pre_header
    _
  $region3: #{pallas_resample.1} parent=0 // loop_header
    %s8 = sphi 0, %s12
    %p9 = scmp.ge.s32.totalorder %s8, 10
    %s15 = sphi 0, %s27
    %s16 = sphi 0, %s23
    %s17 = sphi 0, %s15
    %s18 = sphi 0, %s16
    %s19 = sphi 0, %s17
    %s20 = sphi 0, %s18
    %s32 = sphi 0, %s34
    %s35 = sphi 0, %s32
    %s36 = sphi 0, %s35
    %s52 = sphi 0, %s36
    %s56 = sphi 0, %s56
    %s58 = sphi 0, %s56
    %s59 = sphi 0, %s58
    %s73 = sphi 0, %s59
    %s81 = sphi 0, %s83
    %s84 = sphi 0, %s81
    %s85 = sphi 0, %s84
    %s101 = sphi 0, %s85
  $region4: #{pallas_resample.1} parent=0 // loop_header_branch
    %11 = sbr.rel (%p9) target = $region8
  $region5: #{pallas_resample.1} parent=0 // loop_body
    %s13 = ssub.s32 %s8, 1
    %s14 = ssub.s32 %s8, 2
    %s21 = sadd.s32 1, %s16
    %p22 = scmp.ge.s32.totalorder %s21, 1
    %s23 = scalar_select %p22, 0, %s21
    %s24 = sadd.s32 1, %s15
    %s25 = scalar_select %p22, %s24, %s15
    %p26 = scmp.ge.s32.totalorder %s25, 8
    %s27 = scalar_select %p26, 0, %s25
    %s28 = ssub.s32 %s15, %s27
    %s29 = ssub.s32 %s16, %s23
    %s30 = sor.u32 %s28, %s29
    %p31 = scmp.eq.s32.totalorder %s30, 0
    %s33 = sadd.s32 %s32, 1
    %s34 = scalar_select %p31, %s32, %s33
    %p37 = pneg %p31
    %p38 = scmp.eq.s32.totalorder %s8, 7
    %p39 = por %p37, %p38
    %p40 = scmp.ne.s32.totalorder %s32, %s35
    %p41 = scmp.eq.s32.totalorder %s8, 0
    %p42 = por %p40, %p41
    %p43 = scmp.ne.s32.totalorder %s32, %s35
    %p44 = scmp.eq.s32.totalorder %s13, 7
    %p45 = por %p43, %p44
    %p46 = scmp.ne.s32.totalorder %s35, %s36
    %p47 = scmp.eq.s32.totalorder %s13, 0
    %p48 = por %p46, %p47
    %p49 = scmp.ne.s32.totalorder %s35, %s36
    %p50 = scmp.eq.s32.totalorder %s14, 7
    %p51 = por %p49, %p50
    %p53 = scmp.ne.s32.totalorder %s36, %s52
    %p54 = scmp.eq.s32.totalorder %s14, 0
    %p55 = por %p53, %p54
    %s57 = sadd.s32 %s56, 1
    %p60 = scmp.eq.s32.totalorder %s8, 7
    %p61 = scmp.ne.s32.totalorder %s56, %s58
    %p62 = scmp.eq.s32.totalorder %s8, 0
    %p63 = por %p61, %p62
    %p64 = scmp.ne.s32.totalorder %s56, %s58
    %p65 = scmp.eq.s32.totalorder %s13, 7
    %p66 = por %p64, %p65
    %p67 = scmp.ne.s32.totalorder %s58, %s59
    %p68 = scmp.eq.s32.totalorder %s13, 0
    %p69 = por %p67, %p68
    %p70 = scmp.ne.s32.totalorder %s58, %s59
    %p71 = scmp.eq.s32.totalorder %s14, 7
    %p72 = por %p70, %p71
    %p74 = scmp.ne.s32.totalorder %s59, %s73
    %p75 = scmp.eq.s32.totalorder %s14, 0
    %p76 = por %p74, %p75
    %s77 = ssub.s32 %s15, %s27
    %s78 = ssub.s32 %s16, %s23
    %s79 = sor.u32 %s77, %s78
    %p80 = scmp.eq.s32.totalorder %s79, 0
    %s82 = sadd.s32 %s81, 1
    %s83 = scalar_select %p80, %s81, %s82
    %p86 = pneg %p80
    %p87 = scmp.eq.s32.totalorder %s8, 7
    %p88 = por %p86, %p87
    %p89 = scmp.ne.s32.totalorder %s81, %s84
    %p90 = scmp.eq.s32.totalorder %s8, 0
    %p91 = por %p89, %p90
    %p92 = scmp.ne.s32.totalorder %s81, %s84
    %p93 = scmp.eq.s32.totalorder %s13, 7
    %p94 = por %p92, %p93
    %p95 = scmp.ne.s32.totalorder %s84, %s85
    %p96 = scmp.eq.s32.totalorder %s13, 0
    %p97 = por %p95, %p96
    %p98 = scmp.ne.s32.totalorder %s84, %s85
    %p99 = scmp.eq.s32.totalorder %s14, 7
    %p100 = por %p98, %p99
    %p102 = scmp.ne.s32.totalorder %s85, %s101
    %p103 = scmp.eq.s32.totalorder %s14, 0
    %p104 = por %p102, %p103
    %p105 = scmp.le.s32.totalorder 1, %s8
    %p106 = scmp.lt.s32.totalorder %s8, 9
    %p107 = pnand %p105, %p106
    %p108 = pneg %p107
    // Predicated region
    $region9: #{pallas_resample.1} parent=5 // pred_check
      _
    $region10: #{pallas_resample.1} parent=5 // pred_check_branch
      %110 = sbr.rel (%p107) target = $region12
    $region11: #{pallas_resample.1} parent=5 // pred_region
      %s111 = ssub.s32 %s8, 1
      // Predicated region
      $region13: #{pallas_resample.1} parent=11 // pred_check
        %p112 = pneg %p69
      $region14: #{pallas_resample.1} parent=11 // pred_check_branch
        %114 = sbr.rel (%p112) target = $region16
      $region15: #{pallas_resample.1} parent=11 // pred_region
        _
      $region16: #{pallas_resample.1} parent=11 // pred_fallthru
        _
    $region12: #{pallas_resample.1} parent=5 // pred_fallthru
      _
    %p115 = scmp.lt.s32.totalorder %s8, 8
    // Predicated region
    $region17: #{pallas_resample.1} parent=5 // pred_check
      %p116 = pneg %p115
    $region18: #{pallas_resample.1} parent=5 // pred_check_branch
      %118 = sbr.rel (%p116) target = $region20
    $region19: #{pallas_resample.1} parent=5 // pred_region
      // Predicated region
      $region21: #{pallas_resample.1} parent=19 // pred_check
        %p119 = pneg %p42
      $region22: #{pallas_resample.1} parent=19 // pred_check_branch
        %121 = sbr.rel (%p119) target = $region24
      $region23: #{pallas_resample.1} parent=19 // pred_region
        %p122 = scmp.lt.s32.totalorder %s15, 7
        %s123 = scalar_select %p122, %s15, 7
        %p124 = scmp.lt.s32.totalorder %s16, 0
        %s125 = scalar_select %p124, %s16, 0
        %s126 = smul.addr %s125, 6
        %s127 = smul.addr %s123, 6
        %s128 = sadd.s32 %s126, %s127
        %s129 = smul.addr %s128, 8
        %s130 = scalar_lea.vmem %s0, %s129
      $region24: #{pallas_resample.1} parent=19 // pred_fallthru
        _
    $region20: #{pallas_resample.1} parent=5 // pred_fallthru
      _
    %p131 = scmp.le.s32.totalorder 1, %s8
    %p132 = scmp.lt.s32.totalorder %s8, 9
    %p133 = pnand %p131, %p132
    %p134 = pneg %p133
    // Predicated region
    $region25: #{pallas_resample.1} parent=5 // pred_check
      _
    $region26: #{pallas_resample.1} parent=5 // pred_check_branch
      %136 = sbr.rel (%p133) target = $region28
    $region27: #{pallas_resample.1} parent=5 // pred_region
      %s137 = ssub.s32 %s8, 1
      %p138 = scmp.lt.s32.totalorder %s17, 7
      %s139 = scalar_select %p138, %s17, 7
      %p140 = scmp.lt.s32.totalorder %s18, 0
      %s141 = scalar_select %p140, %s18, 0
      %s142 = smul.addr %s141, 6
      %s143 = smul.addr %s139, 6
      %s144 = sadd.s32 %s142, %s143
      %s145 = smul.addr %s144, 8
      %s146 = scalar_lea.vmem %s0, %s145
      %p147 = pneg %p48
      %p148 = pneg %p45
      %p149 = pneg %p69
      %p150 = pneg %p66
      %p151 = pneg %p97
      %p152 = pneg %p94
      %p153 = scmp.lt.s32.totalorder %s17, 7
      %s154 = scalar_select %p153, %s17, 7
      %p155 = scmp.lt.s32.totalorder %s18, 0
      %s156 = scalar_select %p155, %s18, 0
      %s157 = smul.addr %s156, 5
      %s158 = smul.addr %s154, 5
      %s159 = sadd.s32 %s157, %s158
      %s160 = smul.addr %s159, 8
      %s161 = scalar_lea.vmem %s2, %s160
      %p162 = scmp.lt.s32.totalorder %s17, 7
      %s163 = scalar_select %p162, %s17, 7
      %p164 = scmp.lt.s32.totalorder %s18, 0
      %s165 = scalar_select %p164, %s18, 0
      %s166 = smul.addr %s165, 6
      %s167 = smul.addr %s163, 6
      %s168 = sadd.s32 %s166, %s167
      %s169 = smul.addr %s168, 8
      %s170 = scalar_lea.vmem %s0, %s169
      %p171 = scmp.lt.s32.totalorder %s17, 7
      %s172 = scalar_select %p171, %s17, 7
      %p173 = scmp.lt.s32.totalorder %s18, 0
      %s174 = scalar_select %p173, %s18, 0
      %s175 = smul.addr %s174, 5
      %s176 = smul.addr %s172, 5
      %s177 = sadd.s32 %s175, %s176
      %s178 = smul.addr %s177, 8
      %s179 = scalar_lea.vmem %s2, %s178
      %v180 = vld [vmem:[%s170] sm:$0xff]
      %v181 = vld [vmem:[%s170 + $0x8] sm:$0xff]
      %v182 = vld [vmem:[%s170 + $0x10] sm:$0xff]
      %v183 = vld [vmem:[%s170 + $0x18] sm:$0xff]
      %v184 = vld [vmem:[%s170 + $0x20] sm:$0xff]
      %v185 = vld [vmem:[%s1] sm:$0x3]
      %v186 = vld [vmem:[%s170 + $0x1] sm:$0xff]
      %v187 = vld [vmem:[%s170 + $0x9] sm:$0xff]
      %v188 = vld [vmem:[%s170 + $0x11] sm:$0xff]
      %v189 = vld [vmem:[%s170 + $0x19] sm:$0xff]
      %v190 = vld [vmem:[%s170 + $0x21] sm:$0xff]
      %s191 = scalar_lea.vmem %s1, 2
      %v192 = vld [vmem:[%s191] sm:$0x3]
      %vm193 = vcmask 15360
      %v195 = vsel %vm193, %v186, 0
      %v198 = vsel %vm193, %v187, 0
      %v201 = vsel %vm193, %v188, 0
      %v204 = vsel %vm193, %v189, 0
      %v207 = vsel %vm193, %v190, 0
      %vm209 = vcmask 1041408
      %v211 = vsel %vm209, %v192, 0
      %213 = vmatprep.subr.mxu0 0.0
      %214 = vmatpush1.msra.mxu0 %v211
      %215 = vmatprep.subr.mxu0 0.0
      %216 = vmatpush1.msra.mxu0 0.0
      %217 = vmatprep.subr.mxu0 0.0
      %218 = vmatpush1.msra.mxu0 0.0
      %219 = vmatprep.subr.mxu0 0.0
      %220 = vmatpush1.msra.mxu0 0.0
      %221 = vmatprep.subr.mxu0 0.0
      %222 = vmatpush1.msra.mxu0 0.0
      %223 = vmatprep.subr.mxu0 0.0
      %224 = vmatpush1.msra.mxu0 0.0
      %225 = vmatprep.subr.mxu0 0.0
      %226 = vmatpush1.msra.mxu0 0.0
      %227 = vmatprep.subr.mxu0 0.0
      %228 = vmatpush1.msra.mxu0 0.0
      %229 = vmatprep.subr.mxu0 0.0
      %230 = vmatpush1.msra.mxu0 0.0
      %231 = vmatprep.subr.mxu0 0.0
      %232 = vmatpush1.msra.mxu0 0.0
      %233 = vmatprep.subr.mxu0 0.0
      %234 = vmatpush1.msra.mxu0 0.0
      %235 = vmatprep.subr.mxu0 0.0
      %236 = vmatpush1.msra.mxu0 0.0
      %237 = vmatprep.subr.mxu0 0.0
      %238 = vmatpush1.msra.mxu0 0.0
      %239 = vmatprep.subr.mxu0 0.0
      %240 = vmatpush1.msra.mxu0 0.0
      %241 = vmatprep.subr.mxu0 0.0
      %242 = vmatpush1.msra.mxu0 0.0
      %243 = vmatprep.subr.mxu0 0.0
      %244 = vmatpush1.msra.mxu0 0.0
      %245 = vmatprep.subr.mxu0 0.0
      %246 = vmatpush1.msra.mxu0 0.0
      %247 = vmatprep.subr.mxu0 0.0
      %248 = vmatpush1.msra.mxu0 0.0
      %249 = vmatprep.subr.mxu0 0.0
      %250 = vmatpush1.msra.mxu0 0.0
      %251 = vmatprep.subr.mxu0 0.0
      %252 = vmatpush1.msra.mxu0 0.0
      %253 = vmatprep.subr.mxu0 0.0
      %254 = vmatpush1.msra.mxu0 0.0
      %255 = vmatprep.subr.mxu0 0.0
      %256 = vmatpush1.msra.mxu0 0.0
      %257 = vmatprep.subr.mxu0 0.0
      %258 = vmatpush1.msra.mxu0 0.0
      %259 = vmatprep.subr.mxu0 0.0
      %260 = vmatpush1.msra.mxu0 0.0
      %261 = vmatprep.subr.mxu0 0.0
      %262 = vmatpush1.msra.mxu0 0.0
      %263 = vmatprep.subr.mxu0 0.0
      %264 = vmatpush1.msra.mxu0 0.0
      %265 = vmatprep.subr.mxu0 0.0
      %266 = vmatpush1.msra.mxu0 0.0
      %267 = vmatprep.subr.mxu0 0.0
      %268 = vmatpush1.msra.mxu0 0.0
      %269 = vmatprep.subr.mxu0 0.0
      %270 = vmatpush1.msra.mxu0 0.0
      %271 = vmatprep.subr.mxu0 0.0
      %272 = vmatpush1.msra.mxu0 0.0
      %273 = vmatprep.subr.mxu0 0.0
      %274 = vmatpush1.msra.mxu0 0.0
      %275 = vmatprep.subr.mxu0 0.0
      %276 = vmatpush1.msra.mxu0 0.0
      %277 = vmatprep.mubr.f32.mxu0 0.0
      %278 = vmatmul.mubr.f32.gmra.mrb[0].mxu0 %v195
      %v279 = vpop.f32.mrb[0].mxu0
      %v280 = vadd.f32 0.0, %v279
      %v281 = vpop.f32.mrb[0].mxu0
      %282 = vmatprep.mubr.f32.mxu0 0.0
      %283 = vmatmul.mubr.f32.gmra.mrb[0].mxu0 %v198
      %v284 = vpop.f32.mrb[0].mxu0
      %v285 = vadd.f32 0.0, %v284
      %v286 = vpop.f32.mrb[0].mxu0
      %287 = vmatprep.mubr.f32.mxu0 0.0
      %288 = vmatmul.mubr.f32.gmra.mrb[0].mxu0 %v201
      %v289 = vpop.f32.mrb[0].mxu0
      %v290 = vadd.f32 0.0, %v289
      %v291 = vpop.f32.mrb[0].mxu0
      %292 = vmatprep.mubr.f32.mxu0 0.0
      %293 = vmatmul.mubr.f32.gmra.mrb[0].mxu0 %v204
      %v294 = vpop.f32.mrb[0].mxu0
      %v295 = vadd.f32 0.0, %v294
      %v296 = vpop.f32.mrb[0].mxu0
      %297 = vmatprep.mubr.f32.mxu0 0.0
      %298 = vmatmul.mubr.f32.gmra.mrb[0].mxu0 %v207
      %v299 = vpop.f32.mrb[0].mxu0
      %v300 = vadd.f32 0.0, %v299
      %v301 = vpop.f32.mrb[0].mxu0
      %302 = vdwg.mxu0
      %v304 = vsel %vm193, %v180, 0
      %v307 = vsel %vm193, %v181, 0
      %v310 = vsel %vm193, %v182, 0
      %v313 = vsel %vm193, %v183, 0
      %v316 = vsel %vm193, %v184, 0
      %v319 = vsel %vm209, %v185, 0
      %321 = vmatprep.subr.mxu0 0.0
      %322 = vmatpush1.msra.mxu0 %v319
      %323 = vmatprep.subr.mxu0 0.0
      %324 = vmatpush1.msra.mxu0 0.0
      %325 = vmatprep.subr.mxu0 0.0
      %326 = vmatpush1.msra.mxu0 0.0
      %327 = vmatprep.subr.mxu0 0.0
      %328 = vmatpush1.msra.mxu0 0.0
      %329 = vmatprep.subr.mxu0 0.0
      %330 = vmatpush1.msra.mxu0 0.0
      %331 = vmatprep.subr.mxu0 0.0
      %332 = vmatpush1.msra.mxu0 0.0
      %333 = vmatprep.subr.mxu0 0.0
      %334 = vmatpush1.msra.mxu0 0.0
      %335 = vmatprep.subr.mxu0 0.0
      %336 = vmatpush1.msra.mxu0 0.0
      %337 = vmatprep.subr.mxu0 0.0
      %338 = vmatpush1.msra.mxu0 0.0
      %339 = vmatprep.subr.mxu0 0.0
      %340 = vmatpush1.msra.mxu0 0.0
      %341 = vmatprep.subr.mxu0 0.0
      %342 = vmatpush1.msra.mxu0 0.0
      %343 = vmatprep.subr.mxu0 0.0
      %344 = vmatpush1.msra.mxu0 0.0
      %345 = vmatprep.subr.mxu0 0.0
      %346 = vmatpush1.msra.mxu0 0.0
      %347 = vmatprep.subr.mxu0 0.0
      %348 = vmatpush1.msra.mxu0 0.0
      %349 = vmatprep.subr.mxu0 0.0
      %350 = vmatpush1.msra.mxu0 0.0
      %351 = vmatprep.subr.mxu0 0.0
      %352 = vmatpush1.msra.mxu0 0.0
      %353 = vmatprep.subr.mxu0 0.0
      %354 = vmatpush1.msra.mxu0 0.0
      %355 = vmatprep.subr.mxu0 0.0
      %356 = vmatpush1.msra.mxu0 0.0
      %357 = vmatprep.subr.mxu0 0.0
      %358 = vmatpush1.msra.mxu0 0.0
      %359 = vmatprep.subr.mxu0 0.0
      %360 = vmatpush1.msra.mxu0 0.0
      %361 = vmatprep.subr.mxu0 0.0
      %362 = vmatpush1.msra.mxu0 0.0
      %363 = vmatprep.subr.mxu0 0.0
      %364 = vmatpush1.msra.mxu0 0.0
      %365 = vmatprep.subr.mxu0 0.0
      %366 = vmatpush1.msra.mxu0 0.0
      %367 = vmatprep.subr.mxu0 0.0
      %368 = vmatpush1.msra.mxu0 0.0
      %369 = vmatprep.subr.mxu0 0.0
      %370 = vmatpush1.msra.mxu0 0.0
      %371 = vmatprep.subr.mxu0 0.0
      %372 = vmatpush1.msra.mxu0 0.0
      %373 = vmatprep.subr.mxu0 0.0
      %374 = vmatpush1.msra.mxu0 0.0
      %375 = vmatprep.subr.mxu0 0.0
      %376 = vmatpush1.msra.mxu0 0.0
      %377 = vmatprep.subr.mxu0 0.0
      %378 = vmatpush1.msra.mxu0 0.0
      %379 = vmatprep.subr.mxu0 0.0
      %380 = vmatpush1.msra.mxu0 0.0
      %381 = vmatprep.subr.mxu0 0.0
      %382 = vmatpush1.msra.mxu0 0.0
      %383 = vmatprep.subr.mxu0 0.0
      %384 = vmatpush1.msra.mxu0 0.0
      %385 = vmatprep.mubr.f32.mxu0 0.0
      %386 = vmatmul.mubr.f32.gmra.mrb[0].mxu0 %v304
      %v387 = vpop.f32.mrb[0].mxu0
      %v388 = vadd.f32 %v280, %v387
      %v389 = vpop.f32.mrb[0].mxu0
      %390 = vmatprep.mubr.f32.mxu0 0.0
      %391 = vmatmul.mubr.f32.gmra.mrb[0].mxu0 %v307
      %v392 = vpop.f32.mrb[0].mxu0
      %v393 = vadd.f32 %v285, %v392
      %v394 = vpop.f32.mrb[0].mxu0
      %395 = vmatprep.mubr.f32.mxu0 0.0
      %396 = vmatmul.mubr.f32.gmra.mrb[0].mxu0 %v310
      %v397 = vpop.f32.mrb[0].mxu0
      %v398 = vadd.f32 %v290, %v397
      %v399 = vpop.f32.mrb[0].mxu0
      %400 = vmatprep.mubr.f32.mxu0 0.0
      %401 = vmatmul.mubr.f32.gmra.mrb[0].mxu0 %v313
      %v402 = vpop.f32.mrb[0].mxu0
      %v403 = vadd.f32 %v295, %v402
      %v404 = vpop.f32.mrb[0].mxu0
      %405 = vmatprep.mubr.f32.mxu0 0.0
      %406 = vmatmul.mubr.f32.gmra.mrb[0].mxu0 %v316
      %v407 = vpop.f32.mrb[0].mxu0
      %v408 = vadd.f32 %v300, %v407
      %v409 = vpop.f32.mrb[0].mxu0
      %410 = vdwg.mxu0
      %v411 = vld [vmem:[%s170 + $0x2] sm:$0xff]
      %v412 = vld [vmem:[%s170 + $0xa] sm:$0xff]
      %v413 = vld [vmem:[%s170 + $0x12] sm:$0xff]
      %v414 = vld [vmem:[%s170 + $0x1a] sm:$0xff]
      %v415 = vld [vmem:[%s170 + $0x22] sm:$0xff]
      %s416 = scalar_lea.vmem %s1, 4
      %v417 = vld [vmem:[%s416] sm:$0x3]
      %v419 = vsel %vm193, %v411, 0
      %v422 = vsel %vm193, %v412, 0
      %v425 = vsel %vm193, %v413, 0
      %v428 = vsel %vm193, %v414, 0
      %v431 = vsel %vm193, %v415, 0
      %v434 = vsel %vm209, %v417, 0
      %436 = vmatprep.subr.mxu0 0.0
      %437 = vmatpush1.msra.mxu0 %v434
      %438 = vmatprep.subr.mxu0 0.0
      %439 = vmatpush1.msra.mxu0 0.0
      %440 = vmatprep.subr.mxu0 0.0
      %441 = vmatpush1.msra.mxu0 0.0
      %442 = vmatprep.subr.mxu0 0.0
      %443 = vmatpush1.msra.mxu0 0.0
      %444 = vmatprep.subr.mxu0 0.0
      %445 = vmatpush1.msra.mxu0 0.0
      %446 = vmatprep.subr.mxu0 0.0
      %447 = vmatpush1.msra.mxu0 0.0
      %448 = vmatprep.subr.mxu0 0.0
      %449 = vmatpush1.msra.mxu0 0.0
      %450 = vmatprep.subr.mxu0 0.0
      %451 = vmatpush1.msra.mxu0 0.0
      %452 = vmatprep.subr.mxu0 0.0
      %453 = vmatpush1.msra.mxu0 0.0
      %454 = vmatprep.subr.mxu0 0.0
      %455 = vmatpush1.msra.mxu0 0.0
      %456 = vmatprep.subr.mxu0 0.0
      %457 = vmatpush1.msra.mxu0 0.0
      %458 = vmatprep.subr.mxu0 0.0
      %459 = vmatpush1.msra.mxu0 0.0
      %460 = vmatprep.subr.mxu0 0.0
      %461 = vmatpush1.msra.mxu0 0.0
      %462 = vmatprep.subr.mxu0 0.0
      %463 = vmatpush1.msra.mxu0 0.0
      %464 = vmatprep.subr.mxu0 0.0
      %465 = vmatpush1.msra.mxu0 0.0
      %466 = vmatprep.subr.mxu0 0.0
      %467 = vmatpush1.msra.mxu0 0.0
      %468 = vmatprep.subr.mxu0 0.0
      %469 = vmatpush1.msra.mxu0 0.0
      %470 = vmatprep.subr.mxu0 0.0
      %471 = vmatpush1.msra.mxu0 0.0
      %472 = vmatprep.subr.mxu0 0.0
      %473 = vmatpush1.msra.mxu0 0.0
      %474 = vmatprep.subr.mxu0 0.0
      %475 = vmatpush1.msra.mxu0 0.0
      %476 = vmatprep.subr.mxu0 0.0
      %477 = vmatpush1.msra.mxu0 0.0
      %478 = vmatprep.subr.mxu0 0.0
      %479 = vmatpush1.msra.mxu0 0.0
      %480 = vmatprep.subr.mxu0 0.0
      %481 = vmatpush1.msra.mxu0 0.0
      %482 = vmatprep.subr.mxu0 0.0
      %483 = vmatpush1.msra.mxu0 0.0
      %484 = vmatprep.subr.mxu0 0.0
      %485 = vmatpush1.msra.mxu0 0.0
      %486 = vmatprep.subr.mxu0 0.0
      %487 = vmatpush1.msra.mxu0 0.0
      %488 = vmatprep.subr.mxu0 0.0
      %489 = vmatpush1.msra.mxu0 0.0
      %490 = vmatprep.subr.mxu0 0.0
      %491 = vmatpush1.msra.mxu0 0.0
      %492 = vmatprep.subr.mxu0 0.0
      %493 = vmatpush1.msra.mxu0 0.0
      %494 = vmatprep.subr.mxu0 0.0
      %495 = vmatpush1.msra.mxu0 0.0
      %496 = vmatprep.subr.mxu0 0.0
      %497 = vmatpush1.msra.mxu0 0.0
      %498 = vmatprep.subr.mxu0 0.0
      %499 = vmatpush1.msra.mxu0 0.0
      %500 = vmatprep.mubr.f32.mxu0 0.0
      %501 = vmatmul.mubr.f32.gmra.mrb[0].mxu0 %v419
      %v502 = vpop.f32.mrb[0].mxu0
      %v503 = vadd.f32 0.0, %v502
      %v504 = vpop.f32.mrb[0].mxu0
      %505 = vmatprep.mubr.f32.mxu0 0.0
      %506 = vmatmul.mubr.f32.gmra.mrb[0].mxu0 %v422
      %v507 = vpop.f32.mrb[0].mxu0
      %v508 = vadd.f32 0.0, %v507
      %v509 = vpop.f32.mrb[0].mxu0
      %510 = vmatprep.mubr.f32.mxu0 0.0
      %511 = vmatmul.mubr.f32.gmra.mrb[0].mxu0 %v425
      %v512 = vpop.f32.mrb[0].mxu0
      %v513 = vadd.f32 0.0, %v512
      %v514 = vpop.f32.mrb[0].mxu0
      %515 = vmatprep.mubr.f32.mxu0 0.0
      %516 = vmatmul.mubr.f32.gmra.mrb[0].mxu0 %v428
      %v517 = vpop.f32.mrb[0].mxu0
      %v518 = vadd.f32 0.0, %v517
      %v519 = vpop.f32.mrb[0].mxu0
      %520 = vmatprep.mubr.f32.mxu0 0.0
      %521 = vmatmul.mubr.f32.gmra.mrb[0].mxu0 %v431
      %v522 = vpop.f32.mrb[0].mxu0
      %v523 = vadd.f32 0.0, %v522
      %v524 = vpop.f32.mrb[0].mxu0
      %525 = vdwg.mxu0
      %v526 = vadd.f32 %v388, %v503
      %v527 = vadd.f32 %v393, %v508
      %v528 = vadd.f32 %v398, %v513
      %v529 = vadd.f32 %v403, %v518
      %v530 = vadd.f32 %v408, %v523
      %v531 = vld [vmem:[%s170 + $0x3] sm:$0xff]
      %v532 = vld [vmem:[%s170 + $0xb] sm:$0xff]
      %v533 = vld [vmem:[%s170 + $0x13] sm:$0xff]
      %v534 = vld [vmem:[%s170 + $0x1b] sm:$0xff]
      %v535 = vld [vmem:[%s170 + $0x23] sm:$0xff]
      %s536 = scalar_lea.vmem %s1, 6
      %v537 = vld [vmem:[%s536] sm:$0x3]
      %v539 = vsel %vm193, %v531, 0
      %v542 = vsel %vm193, %v532, 0
      %v545 = vsel %vm193, %v533, 0
      %v548 = vsel %vm193, %v534, 0
      %v551 = vsel %vm193, %v535, 0
      %v554 = vsel %vm209, %v537, 0
      %556 = vmatprep.subr.mxu0 0.0
      %557 = vmatpush1.msra.mxu0 %v554
      %558 = vmatprep.subr.mxu0 0.0
      %559 = vmatpush1.msra.mxu0 0.0
      %560 = vmatprep.subr.mxu0 0.0
      %561 = vmatpush1.msra.mxu0 0.0
      %562 = vmatprep.subr.mxu0 0.0
      %563 = vmatpush1.msra.mxu0 0.0
      %564 = vmatprep.subr.mxu0 0.0
      %565 = vmatpush1.msra.mxu0 0.0
      %566 = vmatprep.subr.mxu0 0.0
      %567 = vmatpush1.msra.mxu0 0.0
      %568 = vmatprep.subr.mxu0 0.0
      %569 = vmatpush1.msra.mxu0 0.0
      %570 = vmatprep.subr.mxu0 0.0
      %571 = vmatpush1.msra.mxu0 0.0
      %572 = vmatprep.subr.mxu0 0.0
      %573 = vmatpush1.msra.mxu0 0.0
      %574 = vmatprep.subr.mxu0 0.0
      %575 = vmatpush1.msra.mxu0 0.0
      %576 = vmatprep.subr.mxu0 0.0
      %577 = vmatpush1.msra.mxu0 0.0
      %578 = vmatprep.subr.mxu0 0.0
      %579 = vmatpush1.msra.mxu0 0.0
      %580 = vmatprep.subr.mxu0 0.0
      %581 = vmatpush1.msra.mxu0 0.0
      %582 = vmatprep.subr.mxu0 0.0
      %583 = vmatpush1.msra.mxu0 0.0
      %584 = vmatprep.subr.mxu0 0.0
      %585 = vmatpush1.msra.mxu0 0.0
      %586 = vmatprep.subr.mxu0 0.0
      %587 = vmatpush1.msra.mxu0 0.0
      %588 = vmatprep.subr.mxu0 0.0
      %589 = vmatpush1.msra.mxu0 0.0
      %590 = vmatprep.subr.mxu0 0.0
      %591 = vmatpush1.msra.mxu0 0.0
      %592 = vmatprep.subr.mxu0 0.0
      %593 = vmatpush1.msra.mxu0 0.0
      %594 = vmatprep.subr.mxu0 0.0
      %595 = vmatpush1.msra.mxu0 0.0
      %596 = vmatprep.subr.mxu0 0.0
      %597 = vmatpush1.msra.mxu0 0.0
      %598 = vmatprep.subr.mxu0 0.0
      %599 = vmatpush1.msra.mxu0 0.0
      %600 = vmatprep.subr.mxu0 0.0
      %601 = vmatpush1.msra.mxu0 0.0
      %602 = vmatprep.subr.mxu0 0.0
      %603 = vmatpush1.msra.mxu0 0.0
      %604 = vmatprep.subr.mxu0 0.0
      %605 = vmatpush1.msra.mxu0 0.0
      %606 = vmatprep.subr.mxu0 0.0
      %607 = vmatpush1.msra.mxu0 0.0
      %608 = vmatprep.subr.mxu0 0.0
      %609 = vmatpush1.msra.mxu0 0.0
      %610 = vmatprep.subr.mxu0 0.0
      %611 = vmatpush1.msra.mxu0 0.0
      %612 = vmatprep.subr.mxu0 0.0
      %613 = vmatpush1.msra.mxu0 0.0
      %614 = vmatprep.subr.mxu0 0.0
      %615 = vmatpush1.msra.mxu0 0.0
      %616 = vmatprep.subr.mxu0 0.0
      %617 = vmatpush1.msra.mxu0 0.0
      %618 = vmatprep.subr.mxu0 0.0
      %619 = vmatpush1.msra.mxu0 0.0
      %620 = vmatprep.mubr.f32.mxu0 0.0
      %621 = vmatmul.mubr.f32.gmra.mrb[0].mxu0 %v539
      %v622 = vpop.f32.mrb[0].mxu0
      %v623 = vadd.f32 0.0, %v622
      %v624 = vpop.f32.mrb[0].mxu0
      %625 = vmatprep.mubr.f32.mxu0 0.0
      %626 = vmatmul.mubr.f32.gmra.mrb[0].mxu0 %v542
      %v627 = vpop.f32.mrb[0].mxu0
      %v628 = vadd.f32 0.0, %v627
      %v629 = vpop.f32.mrb[0].mxu0
      %630 = vmatprep.mubr.f32.mxu0 0.0
      %631 = vmatmul.mubr.f32.gmra.mrb[0].mxu0 %v545
      %v632 = vpop.f32.mrb[0].mxu0
      %v633 = vadd.f32 0.0, %v632
      %v634 = vpop.f32.mrb[0].mxu0
      %635 = vmatprep.mubr.f32.mxu0 0.0
      %636 = vmatmul.mubr.f32.gmra.mrb[0].mxu0 %v548
      %v637 = vpop.f32.mrb[0].mxu0
      %v638 = vadd.f32 0.0, %v637
      %v639 = vpop.f32.mrb[0].mxu0
      %640 = vmatprep.mubr.f32.mxu0 0.0
      %641 = vmatmul.mubr.f32.gmra.mrb[0].mxu0 %v551
      %v642 = vpop.f32.mrb[0].mxu0
      %v643 = vadd.f32 0.0, %v642
      %v644 = vpop.f32.mrb[0].mxu0
      %645 = vdwg.mxu0
      %v646 = vadd.f32 %v526, %v623
      %v647 = vadd.f32 %v527, %v628
      %v648 = vadd.f32 %v528, %v633
      %v649 = vadd.f32 %v529, %v638
      %v650 = vadd.f32 %v530, %v643
      %v651 = vld [vmem:[%s170 + $0x4] sm:$0xff]
      %v652 = vld [vmem:[%s170 + $0xc] sm:$0xff]
      %v653 = vld [vmem:[%s170 + $0x14] sm:$0xff]
      %v654 = vld [vmem:[%s170 + $0x1c] sm:$0xff]
      %v655 = vld [vmem:[%s170 + $0x24] sm:$0xff]
      %s656 = scalar_lea.vmem %s1, 8
      %v657 = vld [vmem:[%s656] sm:$0x3]
      %v659 = vsel %vm193, %v651, 0
      %v662 = vsel %vm193, %v652, 0
      %v665 = vsel %vm193, %v653, 0
      %v668 = vsel %vm193, %v654, 0
      %v671 = vsel %vm193, %v655, 0
      %v674 = vsel %vm209, %v657, 0
      %676 = vmatprep.subr.mxu0 0.0
      %677 = vmatpush1.msra.mxu0 %v674
      %678 = vmatprep.subr.mxu0 0.0
      %679 = vmatpush1.msra.mxu0 0.0
      %680 = vmatprep.subr.mxu0 0.0
      %681 = vmatpush1.msra.mxu0 0.0
      %682 = vmatprep.subr.mxu0 0.0
      %683 = vmatpush1.msra.mxu0 0.0
      %684 = vmatprep.subr.mxu0 0.0
      %685 = vmatpush1.msra.mxu0 0.0
      %686 = vmatprep.subr.mxu0 0.0
      %687 = vmatpush1.msra.mxu0 0.0
      %688 = vmatprep.subr.mxu0 0.0
      %689 = vmatpush1.msra.mxu0 0.0
      %690 = vmatprep.subr.mxu0 0.0
      %691 = vmatpush1.msra.mxu0 0.0
      %692 = vmatprep.subr.mxu0 0.0
      %693 = vmatpush1.msra.mxu0 0.0
      %694 = vmatprep.subr.mxu0 0.0
      %695 = vmatpush1.msra.mxu0 0.0
      %696 = vmatprep.subr.mxu0 0.0
      %697 = vmatpush1.msra.mxu0 0.0
      %698 = vmatprep.subr.mxu0 0.0
      %699 = vmatpush1.msra.mxu0 0.0
      %700 = vmatprep.subr.mxu0 0.0
      %701 = vmatpush1.msra.mxu0 0.0
      %702 = vmatprep.subr.mxu0 0.0
      %703 = vmatpush1.msra.mxu0 0.0
      %704 = vmatprep.subr.mxu0 0.0
      %705 = vmatpush1.msra.mxu0 0.0
      %706 = vmatprep.subr.mxu0 0.0
      %707 = vmatpush1.msra.mxu0 0.0
      %708 = vmatprep.subr.mxu0 0.0
      %709 = vmatpush1.msra.mxu0 0.0
      %710 = vmatprep.subr.mxu0 0.0
      %711 = vmatpush1.msra.mxu0 0.0
      %712 = vmatprep.subr.mxu0 0.0
      %713 = vmatpush1.msra.mxu0 0.0
      %714 = vmatprep.subr.mxu0 0.0
      %715 = vmatpush1.msra.mxu0 0.0
      %716 = vmatprep.subr.mxu0 0.0
      %717 = vmatpush1.msra.mxu0 0.0
      %718 = vmatprep.subr.mxu0 0.0
      %719 = vmatpush1.msra.mxu0 0.0
      %720 = vmatprep.subr.mxu0 0.0
      %721 = vmatpush1.msra.mxu0 0.0
      %722 = vmatprep.subr.mxu0 0.0
      %723 = vmatpush1.msra.mxu0 0.0
      %724 = vmatprep.subr.mxu0 0.0
      %725 = vmatpush1.msra.mxu0 0.0
      %726 = vmatprep.subr.mxu0 0.0
      %727 = vmatpush1.msra.mxu0 0.0
      %728 = vmatprep.subr.mxu0 0.0
      %729 = vmatpush1.msra.mxu0 0.0
      %730 = vmatprep.subr.mxu0 0.0
      %731 = vmatpush1.msra.mxu0 0.0
      %732 = vmatprep.subr.mxu0 0.0
      %733 = vmatpush1.msra.mxu0 0.0
      %734 = vmatprep.subr.mxu0 0.0
      %735 = vmatpush1.msra.mxu0 0.0
      %736 = vmatprep.subr.mxu0 0.0
      %737 = vmatpush1.msra.mxu0 0.0
      %738 = vmatprep.subr.mxu0 0.0
      %739 = vmatpush1.msra.mxu0 0.0
      %740 = vmatprep.mubr.f32.mxu0 0.0
      %741 = vmatmul.mubr.f32.gmra.mrb[0].mxu0 %v659
      %v742 = vpop.f32.mrb[0].mxu0
      %v743 = vadd.f32 0.0, %v742
      %v744 = vpop.f32.mrb[0].mxu0
      %745 = vmatprep.mubr.f32.mxu0 0.0
      %746 = vmatmul.mubr.f32.gmra.mrb[0].mxu0 %v662
      %v747 = vpop.f32.mrb[0].mxu0
      %v748 = vadd.f32 0.0, %v747
      %v749 = vpop.f32.mrb[0].mxu0
      %750 = vmatprep.mubr.f32.mxu0 0.0
      %751 = vmatmul.mubr.f32.gmra.mrb[0].mxu0 %v665
      %v752 = vpop.f32.mrb[0].mxu0
      %v753 = vadd.f32 0.0, %v752
      %v754 = vpop.f32.mrb[0].mxu0
      %755 = vmatprep.mubr.f32.mxu0 0.0
      %756 = vmatmul.mubr.f32.gmra.mrb[0].mxu0 %v668
      %v757 = vpop.f32.mrb[0].mxu0
      %v758 = vadd.f32 0.0, %v757
      %v759 = vpop.f32.mrb[0].mxu0
      %760 = vmatprep.mubr.f32.mxu0 0.0
      %761 = vmatmul.mubr.f32.gmra.mrb[0].mxu0 %v671
      %v762 = vpop.f32.mrb[0].mxu0
      %v763 = vadd.f32 0.0, %v762
      %v764 = vpop.f32.mrb[0].mxu0
      %765 = vdwg.mxu0
      %v766 = vadd.f32 %v646, %v743
      %v767 = vadd.f32 %v647, %v748
      %v768 = vadd.f32 %v648, %v753
      %v769 = vadd.f32 %v649, %v758
      %v770 = vadd.f32 %v650, %v763
      %v771 = vld [vmem:[%s170 + $0x5] sm:$0xff]
      %v772 = vld [vmem:[%s170 + $0xd] sm:$0xff]
      %v773 = vld [vmem:[%s170 + $0x15] sm:$0xff]
      %v774 = vld [vmem:[%s170 + $0x1d] sm:$0xff]
      %v775 = vld [vmem:[%s170 + $0x25] sm:$0xff]
      %s776 = scalar_lea.vmem %s1, 10
      %v777 = vld [vmem:[%s776] sm:$0x3]
      %v779 = vsel %vm193, %v771, 0
      %v782 = vsel %vm193, %v772, 0
      %v785 = vsel %vm193, %v773, 0
      %v788 = vsel %vm193, %v774, 0
      %v791 = vsel %vm193, %v775, 0
      %v794 = vsel %vm209, %v777, 0
      %796 = vmatprep.subr.mxu0 0.0
      %797 = vmatpush1.msra.mxu0 %v794
      %798 = vmatprep.subr.mxu0 0.0
      %799 = vmatpush1.msra.mxu0 0.0
      %800 = vmatprep.subr.mxu0 0.0
      %801 = vmatpush1.msra.mxu0 0.0
      %802 = vmatprep.subr.mxu0 0.0
      %803 = vmatpush1.msra.mxu0 0.0
      %804 = vmatprep.subr.mxu0 0.0
      %805 = vmatpush1.msra.mxu0 0.0
      %806 = vmatprep.subr.mxu0 0.0
      %807 = vmatpush1.msra.mxu0 0.0
      %808 = vmatprep.subr.mxu0 0.0
      %809 = vmatpush1.msra.mxu0 0.0
      %810 = vmatprep.subr.mxu0 0.0
      %811 = vmatpush1.msra.mxu0 0.0
      %812 = vmatprep.subr.mxu0 0.0
      %813 = vmatpush1.msra.mxu0 0.0
      %814 = vmatprep.subr.mxu0 0.0
      %815 = vmatpush1.msra.mxu0 0.0
      %816 = vmatprep.subr.mxu0 0.0
      %817 = vmatpush1.msra.mxu0 0.0
      %818 = vmatprep.subr.mxu0 0.0
      %819 = vmatpush1.msra.mxu0 0.0
      %820 = vmatprep.subr.mxu0 0.0
      %821 = vmatpush1.msra.mxu0 0.0
      %822 = vmatprep.subr.mxu0 0.0
      %823 = vmatpush1.msra.mxu0 0.0
      %824 = vmatprep.subr.mxu0 0.0
      %825 = vmatpush1.msra.mxu0 0.0
      %826 = vmatprep.subr.mxu0 0.0
      %827 = vmatpush1.msra.mxu0 0.0
      %828 = vmatprep.subr.mxu0 0.0
      %829 = vmatpush1.msra.mxu0 0.0
      %830 = vmatprep.subr.mxu0 0.0
      %831 = vmatpush1.msra.mxu0 0.0
      %832 = vmatprep.subr.mxu0 0.0
      %833 = vmatpush1.msra.mxu0 0.0
      %834 = vmatprep.subr.mxu0 0.0
      %835 = vmatpush1.msra.mxu0 0.0
      %836 = vmatprep.subr.mxu0 0.0
      %837 = vmatpush1.msra.mxu0 0.0
      %838 = vmatprep.subr.mxu0 0.0
      %839 = vmatpush1.msra.mxu0 0.0
      %840 = vmatprep.subr.mxu0 0.0
      %841 = vmatpush1.msra.mxu0 0.0
      %842 = vmatprep.subr.mxu0 0.0
      %843 = vmatpush1.msra.mxu0 0.0
      %844 = vmatprep.subr.mxu0 0.0
      %845 = vmatpush1.msra.mxu0 0.0
      %846 = vmatprep.subr.mxu0 0.0
      %847 = vmatpush1.msra.mxu0 0.0
      %848 = vmatprep.subr.mxu0 0.0
      %849 = vmatpush1.msra.mxu0 0.0
      %850 = vmatprep.subr.mxu0 0.0
      %851 = vmatpush1.msra.mxu0 0.0
      %852 = vmatprep.subr.mxu0 0.0
      %853 = vmatpush1.msra.mxu0 0.0
      %854 = vmatprep.subr.mxu0 0.0
      %855 = vmatpush1.msra.mxu0 0.0
      %856 = vmatprep.subr.mxu0 0.0
      %857 = vmatpush1.msra.mxu0 0.0
      %858 = vmatprep.subr.mxu0 0.0
      %859 = vmatpush1.msra.mxu0 0.0
      %860 = vmatprep.mubr.f32.mxu0 0.0
      %861 = vmatmul.mubr.f32.gmra.mrb[0].mxu0 %v779
      %v862 = vpop.f32.mrb[0].mxu0
      %v863 = vadd.f32 0.0, %v862
      %v864 = vpop.f32.mrb[0].mxu0
      %865 = vmatprep.mubr.f32.mxu0 0.0
      %866 = vmatmul.mubr.f32.gmra.mrb[0].mxu0 %v782
      %v867 = vpop.f32.mrb[0].mxu0
      %v868 = vadd.f32 0.0, %v867
      %v869 = vpop.f32.mrb[0].mxu0
      %870 = vmatprep.mubr.f32.mxu0 0.0
      %871 = vmatmul.mubr.f32.gmra.mrb[0].mxu0 %v785
      %v872 = vpop.f32.mrb[0].mxu0
      %v873 = vadd.f32 0.0, %v872
      %v874 = vpop.f32.mrb[0].mxu0
      %875 = vmatprep.mubr.f32.mxu0 0.0
      %876 = vmatmul.mubr.f32.gmra.mrb[0].mxu0 %v788
      %v877 = vpop.f32.mrb[0].mxu0
      %v878 = vadd.f32 0.0, %v877
      %v879 = vpop.f32.mrb[0].mxu0
      %880 = vmatprep.mubr.f32.mxu0 0.0
      %881 = vmatmul.mubr.f32.gmra.mrb[0].mxu0 %v791
      %v882 = vpop.f32.mrb[0].mxu0
      %v883 = vadd.f32 0.0, %v882
      %v884 = vpop.f32.mrb[0].mxu0
      %885 = vdwg.mxu0
      %v886 = vadd.f32 %v766, %v863
      %v887 = vadd.f32 %v767, %v868
      %v888 = vadd.f32 %v768, %v873
      %v889 = vadd.f32 %v769, %v878
      %v890 = vadd.f32 %v770, %v883
      %v891 = vld [vmem:[%s170 + $0x6] sm:$0xff]
      %v892 = vld [vmem:[%s170 + $0xe] sm:$0xff]
      %v893 = vld [vmem:[%s170 + $0x16] sm:$0xff]
      %v894 = vld [vmem:[%s170 + $0x1e] sm:$0xff]
      %v895 = vld [vmem:[%s170 + $0x26] sm:$0xff]
      %s896 = scalar_lea.vmem %s1, 12
      %v897 = vld [vmem:[%s896] sm:$0x3]
      %v899 = vsel %vm193, %v891, 0
      %v902 = vsel %vm193, %v892, 0
      %v905 = vsel %vm193, %v893, 0
      %v908 = vsel %vm193, %v894, 0
      %v911 = vsel %vm193, %v895, 0
      %v914 = vsel %vm209, %v897, 0
      %916 = vmatprep.subr.mxu0 0.0
      %917 = vmatpush1.msra.mxu0 %v914
      %918 = vmatprep.subr.mxu0 0.0
      %919 = vmatpush1.msra.mxu0 0.0
      %920 = vmatprep.subr.mxu0 0.0
      %921 = vmatpush1.msra.mxu0 0.0
      %922 = vmatprep.subr.mxu0 0.0
      %923 = vmatpush1.msra.mxu0 0.0
      %924 = vmatprep.subr.mxu0 0.0
      %925 = vmatpush1.msra.mxu0 0.0
      %926 = vmatprep.subr.mxu0 0.0
      %927 = vmatpush1.msra.mxu0 0.0
      %928 = vmatprep.subr.mxu0 0.0
      %929 = vmatpush1.msra.mxu0 0.0
      %930 = vmatprep.subr.mxu0 0.0
      %931 = vmatpush1.msra.mxu0 0.0
      %932 = vmatprep.subr.mxu0 0.0
      %933 = vmatpush1.msra.mxu0 0.0
      %934 = vmatprep.subr.mxu0 0.0
      %935 = vmatpush1.msra.mxu0 0.0
      %936 = vmatprep.subr.mxu0 0.0
      %937 = vmatpush1.msra.mxu0 0.0
      %938 = vmatprep.subr.mxu0 0.0
      %939 = vmatpush1.msra.mxu0 0.0
      %940 = vmatprep.subr.mxu0 0.0
      %941 = vmatpush1.msra.mxu0 0.0
      %942 = vmatprep.subr.mxu0 0.0
      %943 = vmatpush1.msra.mxu0 0.0
      %944 = vmatprep.subr.mxu0 0.0
      %945 = vmatpush1.msra.mxu0 0.0
      %946 = vmatprep.subr.mxu0 0.0
      %947 = vmatpush1.msra.mxu0 0.0
      %948 = vmatprep.subr.mxu0 0.0
      %949 = vmatpush1.msra.mxu0 0.0
      %950 = vmatprep.subr.mxu0 0.0
      %951 = vmatpush1.msra.mxu0 0.0
      %952 = vmatprep.subr.mxu0 0.0
      %953 = vmatpush1.msra.mxu0 0.0
      %954 = vmatprep.subr.mxu0 0.0
      %955 = vmatpush1.msra.mxu0 0.0
      %956 = vmatprep.subr.mxu0 0.0
      %957 = vmatpush1.msra.mxu0 0.0
      %958 = vmatprep.subr.mxu0 0.0
      %959 = vmatpush1.msra.mxu0 0.0
      %960 = vmatprep.subr.mxu0 0.0
      %961 = vmatpush1.msra.mxu0 0.0
      %962 = vmatprep.subr.mxu0 0.0
      %963 = vmatpush1.msra.mxu0 0.0
      %964 = vmatprep.subr.mxu0 0.0
      %965 = vmatpush1.msra.mxu0 0.0
      %966 = vmatprep.subr.mxu0 0.0
      %967 = vmatpush1.msra.mxu0 0.0
      %968 = vmatprep.subr.mxu0 0.0
      %969 = vmatpush1.msra.mxu0 0.0
      %970 = vmatprep.subr.mxu0 0.0
      %971 = vmatpush1.msra.mxu0 0.0
      %972 = vmatprep.subr.mxu0 0.0
      %973 = vmatpush1.msra.mxu0 0.0
      %974 = vmatprep.subr.mxu0 0.0
      %975 = vmatpush1.msra.mxu0 0.0
      %976 = vmatprep.subr.mxu0 0.0
      %977 = vmatpush1.msra.mxu0 0.0
      %978 = vmatprep.subr.mxu0 0.0
      %979 = vmatpush1.msra.mxu0 0.0
      %980 = vmatprep.mubr.f32.mxu0 0.0
      %981 = vmatmul.mubr.f32.gmra.mrb[0].mxu0 %v899
      %v982 = vpop.f32.mrb[0].mxu0
      %v983 = vadd.f32 0.0, %v982
      %v984 = vpop.f32.mrb[0].mxu0
      %985 = vmatprep.mubr.f32.mxu0 0.0
      %986 = vmatmul.mubr.f32.gmra.mrb[0].mxu0 %v902
      %v987 = vpop.f32.mrb[0].mxu0
      %v988 = vadd.f32 0.0, %v987
      %v989 = vpop.f32.mrb[0].mxu0
      %990 = vmatprep.mubr.f32.mxu0 0.0
      %991 = vmatmul.mubr.f32.gmra.mrb[0].mxu0 %v905
      %v992 = vpop.f32.mrb[0].mxu0
      %v993 = vadd.f32 0.0, %v992
      %v994 = vpop.f32.mrb[0].mxu0
      %995 = vmatprep.mubr.f32.mxu0 0.0
      %996 = vmatmul.mubr.f32.gmra.mrb[0].mxu0 %v908
      %v997 = vpop.f32.mrb[0].mxu0
      %v998 = vadd.f32 0.0, %v997
      %v999 = vpop.f32.mrb[0].mxu0
      %1000 = vmatprep.mubr.f32.mxu0 0.0
      %1001 = vmatmul.mubr.f32.gmra.mrb[0].mxu0 %v911
      %v1002 = vpop.f32.mrb[0].mxu0
      %v1003 = vadd.f32 0.0, %v1002
      %v1004 = vpop.f32.mrb[0].mxu0
      %1005 = vdwg.mxu0
      %v1006 = vadd.f32 %v886, %v983
      %v1007 = vadd.f32 %v887, %v988
      %v1008 = vadd.f32 %v888, %v993
      %v1009 = vadd.f32 %v889, %v998
      %v1010 = vadd.f32 %v890, %v1003
      %v1011 = vld [vmem:[%s170 + $0x7] sm:$0xff]
      %v1012 = vld [vmem:[%s170 + $0xf] sm:$0xff]
      %v1013 = vld [vmem:[%s170 + $0x17] sm:$0xff]
      %v1014 = vld [vmem:[%s170 + $0x1f] sm:$0xff]
      %v1015 = vld [vmem:[%s170 + $0x27] sm:$0xff]
      %s1016 = scalar_lea.vmem %s1, 14
      %v1017 = vld [vmem:[%s1016] sm:$0x3]
      %v1019 = vsel %vm193, %v1011, 0
      %v1022 = vsel %vm193, %v1012, 0
      %v1025 = vsel %vm193, %v1013, 0
      %v1028 = vsel %vm193, %v1014, 0
      %v1031 = vsel %vm193, %v1015, 0
      %v1034 = vsel %vm209, %v1017, 0
      %1036 = vmatprep.subr.mxu0 0.0
      %1037 = vmatpush1.msra.mxu0 %v1034
      %1038 = vmatprep.subr.mxu0 0.0
      %1039 = vmatpush1.msra.mxu0 0.0
      %1040 = vmatprep.subr.mxu0 0.0
      %1041 = vmatpush1.msra.mxu0 0.0
      %1042 = vmatprep.subr.mxu0 0.0
      %1043 = vmatpush1.msra.mxu0 0.0
      %1044 = vmatprep.subr.mxu0 0.0
      %1045 = vmatpush1.msra.mxu0 0.0
      %1046 = vmatprep.subr.mxu0 0.0
      %1047 = vmatpush1.msra.mxu0 0.0
      %1048 = vmatprep.subr.mxu0 0.0
      %1049 = vmatpush1.msra.mxu0 0.0
      %1050 = vmatprep.subr.mxu0 0.0
      %1051 = vmatpush1.msra.mxu0 0.0
      %1052 = vmatprep.subr.mxu0 0.0
      %1053 = vmatpush1.msra.mxu0 0.0
      %1054 = vmatprep.subr.mxu0 0.0
      %1055 = vmatpush1.msra.mxu0 0.0
      %1056 = vmatprep.subr.mxu0 0.0
      %1057 = vmatpush1.msra.mxu0 0.0
      %1058 = vmatprep.subr.mxu0 0.0
      %1059 = vmatpush1.msra.mxu0 0.0
      %1060 = vmatprep.subr.mxu0 0.0
      %1061 = vmatpush1.msra.mxu0 0.0
      %1062 = vmatprep.subr.mxu0 0.0
      %1063 = vmatpush1.msra.mxu0 0.0
      %1064 = vmatprep.subr.mxu0 0.0
      %1065 = vmatpush1.msra.mxu0 0.0
      %1066 = vmatprep.subr.mxu0 0.0
      %1067 = vmatpush1.msra.mxu0 0.0
      %1068 = vmatprep.subr.mxu0 0.0
      %1069 = vmatpush1.msra.mxu0 0.0
      %1070 = vmatprep.subr.mxu0 0.0
      %1071 = vmatpush1.msra.mxu0 0.0
      %1072 = vmatprep.subr.mxu0 0.0
      %1073 = vmatpush1.msra.mxu0 0.0
      %1074 = vmatprep.subr.mxu0 0.0
      %1075 = vmatpush1.msra.mxu0 0.0
      %1076 = vmatprep.subr.mxu0 0.0
      %1077 = vmatpush1.msra.mxu0 0.0
      %1078 = vmatprep.subr.mxu0 0.0
      %1079 = vmatpush1.msra.mxu0 0.0
      %1080 = vmatprep.subr.mxu0 0.0
      %1081 = vmatpush1.msra.mxu0 0.0
      %1082 = vmatprep.subr.mxu0 0.0
      %1083 = vmatpush1.msra.mxu0 0.0
      %1084 = vmatprep.subr.mxu0 0.0
      %1085 = vmatpush1.msra.mxu0 0.0
      %1086 = vmatprep.subr.mxu0 0.0
      %1087 = vmatpush1.msra.mxu0 0.0
      %1088 = vmatprep.subr.mxu0 0.0
      %1089 = vmatpush1.msra.mxu0 0.0
      %1090 = vmatprep.subr.mxu0 0.0
      %1091 = vmatpush1.msra.mxu0 0.0
      %1092 = vmatprep.subr.mxu0 0.0
      %1093 = vmatpush1.msra.mxu0 0.0
      %1094 = vmatprep.subr.mxu0 0.0
      %1095 = vmatpush1.msra.mxu0 0.0
      %1096 = vmatprep.subr.mxu0 0.0
      %1097 = vmatpush1.msra.mxu0 0.0
      %1098 = vmatprep.subr.mxu0 0.0
      %1099 = vmatpush1.msra.mxu0 0.0
      %1100 = vmatprep.mubr.f32.mxu0 0.0
      %1101 = vmatmul.mubr.f32.gmra.mrb[0].mxu0 %v1019
      %v1102 = vpop.f32.mrb[0].mxu0
      %v1103 = vadd.f32 0.0, %v1102
      %v1104 = vpop.f32.mrb[0].mxu0
      %1105 = vmatprep.mubr.f32.mxu0 0.0
      %1106 = vmatmul.mubr.f32.gmra.mrb[0].mxu0 %v1022
      %v1107 = vpop.f32.mrb[0].mxu0
      %v1108 = vadd.f32 0.0, %v1107
      %v1109 = vpop.f32.mrb[0].mxu0
      %1110 = vmatprep.mubr.f32.mxu0 0.0
      %1111 = vmatmul.mubr.f32.gmra.mrb[0].mxu0 %v1025
      %v1112 = vpop.f32.mrb[0].mxu0
      %v1113 = vadd.f32 0.0, %v1112
      %v1114 = vpop.f32.mrb[0].mxu0
      %1115 = vmatprep.mubr.f32.mxu0 0.0
      %1116 = vmatmul.mubr.f32.gmra.mrb[0].mxu0 %v1028
      %v1117 = vpop.f32.mrb[0].mxu0
      %v1118 = vadd.f32 0.0, %v1117
      %v1119 = vpop.f32.mrb[0].mxu0
      %1120 = vmatprep.mubr.f32.mxu0 0.0
      %1121 = vmatmul.mubr.f32.gmra.mrb[0].mxu0 %v1031
      %v1122 = vpop.f32.mrb[0].mxu0
      %v1123 = vadd.f32 0.0, %v1122
      %v1124 = vpop.f32.mrb[0].mxu0
      %1125 = vdwg.mxu0
      %v1126 = vadd.f32 %v1006, %v1103
      %v1127 = vadd.f32 %v1007, %v1108
      %v1128 = vadd.f32 %v1008, %v1113
      %v1129 = vadd.f32 %v1009, %v1118
      %v1130 = vadd.f32 %v1010, %v1123
      %vm1131 = vcmask 23552
      %1132 = vst.msk [vmem:[%s179] sm:$0xff] %vm1131, %v1126
      %1133 = vst.msk [vmem:[%s179 + $0x8] sm:$0xff] %vm1131, %v1127
      %1134 = vst.msk [vmem:[%s179 + $0x10] sm:$0xff] %vm1131, %v1128
      %1135 = vst.msk [vmem:[%s179 + $0x18] sm:$0xff] %vm1131, %v1129
      %1136 = vst.msk [vmem:[%s179 + $0x20] sm:$0xff] %vm1131, %v1130
      %p1137 = scmp.lt.s32.totalorder %s17, 7
      %s1138 = scalar_select %p1137, %s17, 7
      %p1139 = scmp.lt.s32.totalorder %s18, 0
      %s1140 = scalar_select %p1139, %s18, 0
      %s1141 = smul.addr %s1140, 5
      %s1142 = smul.addr %s1138, 5
      %s1143 = sadd.s32 %s1141, %s1142
      %s1144 = smul.addr %s1143, 8
      %s1145 = scalar_lea.vmem %s2, %s1144
      // Predicated region
      $region29: #{pallas_resample.1} parent=27 // pred_check
        %p1146 = pneg %p94
      $region30: #{pallas_resample.1} parent=27 // pred_check_branch
        %1148 = sbr.rel (%p1146) target = $region32
      $region31: #{pallas_resample.1} parent=27 // pred_region
        _
      $region32: #{pallas_resample.1} parent=27 // pred_fallthru
        _
    $region28: #{pallas_resample.1} parent=5 // pred_fallthru
      _
    %p1149 = scmp.le.s32.totalorder 2, %s8
    // Predicated region
    $region33: #{pallas_resample.1} parent=5 // pred_check
      %p1150 = pneg %p1149
    $region34: #{pallas_resample.1} parent=5 // pred_check_branch
      %1152 = sbr.rel (%p1150) target = $region36
    $region35: #{pallas_resample.1} parent=5 // pred_region
      %s1153 = ssub.s32 %s8, 2
      // Predicated region
      $region37: #{pallas_resample.1} parent=35 // pred_check
        %p1154 = pneg %p100
      $region38: #{pallas_resample.1} parent=35 // pred_check_branch
        %1156 = sbr.rel (%p1154) target = $region40
      $region39: #{pallas_resample.1} parent=35 // pred_region
        %p1157 = scmp.lt.s32.totalorder %s19, 7
        %s1158 = scalar_select %p1157, %s19, 7
        %p1159 = scmp.lt.s32.totalorder %s20, 0
        %s1160 = scalar_select %p1159, %s20, 0
        %s1161 = smul.addr %s1160, 5
        %s1162 = smul.addr %s1158, 5
        %s1163 = sadd.s32 %s1161, %s1162
        %s1164 = smul.addr %s1163, 8
        %s1165 = scalar_lea.vmem %s2, %s1164
      $region40: #{pallas_resample.1} parent=35 // pred_fallthru
        _
    $region36: #{pallas_resample.1} parent=5 // pred_fallthru
      _
  $region6: #{pallas_resample.1} parent=0 // loop_footer
    %s12 = sadd.s32 1, %s8
  $region7: #{pallas_resample.1} parent=0 // loop_footer_branch
    %7 = sbr.rel target = $region3
  $region8: #{pallas_resample.1} parent=0 // loop_exit
    _

</llo_original>
